<compile_context>
chip_gen: v7x
topology: tpu7x:2x2x1
jax: 0.10.0
libtpu: 0.0.40
codegen_flags: <defaults>
</compile_context>

<pallas_src>
import functools
import math

import jax
import jax.numpy as jnp
from jax import lax
from jax.experimental import pallas as pl
from jax.experimental.pallas import tpu as pltpu


_LOG2_E = 1.4426950408889634
_KV_RESIDENT_VMEM_BUDGET = 40 * 1024 * 1024   # conservative vs v7x's 64 MiB VMEM


def _round_up(x: int, m: int) -> int:
    return (x + m - 1) // m * m


def _cdiv(a: int, b: int) -> int:
    return (a + b - 1) // b


def _flash_attn_kernel(q_ref, k_ref, v_ref, o_ref, m_sc, l_sc, acc_sc, *,
                       seq_len, block_kv, num_kv_tiles, kv_padded, approx_recip):
    ki = pl.program_id(2)

    @pl.when(ki == 0)
    def _():
        m_sc[...] = jnp.full_like(m_sc, -jnp.inf)
        l_sc[...] = jnp.zeros_like(l_sc)
        acc_sc[...] = jnp.zeros_like(acc_sc)

    q = q_ref[0]   # (tq, d)  -- pre-scaled by log2(e)/sqrt(d_out) via W_query
    k = k_ref[0]   # (tkv, d)

    # QK^T without materializing a transposed K: contract head dim of both.
    s = lax.dot_general(q, k, (((1,), (1,)), ((), ())),
                        preferred_element_type=jnp.float32)   # (tq, tkv) f32

    if kv_padded:  # static: only emitted when the sequence was padded
        def _mask_padded(t):
            key_idx = ki * block_kv + lax.broadcasted_iota(jnp.int32, t.shape, 1)
            return jnp.where(key_idx < seq_len, t, -1e30)

        if num_kv_tiles == 1:
            s = _mask_padded(s)
        else:
            # Only the last kv tile can contain padded keys; interior steps skip
            # the iota/compare/select on the VPU entirely.
            s = lax.cond(ki == num_kv_tiles - 1, _mask_padded, lambda t: t, s)

    # Online softmax in the exp2 domain (log2(e) folded into the query scale).
    m_prev = m_sc[...]                                             # (tq, 1)
    m_new = jnp.maximum(m_prev, jnp.max(s, axis=-1, keepdims=True))
    alpha = jnp.exp2(m_prev - m_new)
    p = jnp.exp2(s - m_new)                                        # unnormalized
    l_sc[...] = alpha * l_sc[...] + jnp.sum(p, axis=-1, keepdims=True)
    acc_sc[...] = alpha * acc_sc[...] + jnp.dot(
        p.astype(v_ref.dtype), v_ref[0], preferred_element_type=jnp.float32)
    m_sc[...] = m_new

    @pl.when(ki == num_kv_tiles - 1)
    def _():
        inv_l = pl.reciprocal(l_sc[...], approx=approx_recip)      # EUP when approx
        o_ref[0] = (acc_sc[...] * inv_l).astype(o_ref.dtype)


def causal_self_attention(x, w_query, w_key, w_value, *,
                          block_q=512, block_kv=512,
                          compute_dtype=jnp.bfloat16,
                          approx_recip=True,
                          out_dtype=None,
                          kv_resident=None,        # None/True: auto, False: force tiled kv
                          kv_buffer_count=2,       # set 3 on bandwidth-poor v5e
                          vmem_limit_bytes=None):
    """x: (B, T, d_in); w_*: (d_in, d_out) (transposed from PyTorch nn.Linear)."""
    B, T, d_in = x.shape
    d_out = w_query.shape[1]
    out_dtype = x.dtype if out_dtype is None else out_dtype

    # ---- tile selection --------------------------------------------------
    T8 = _round_up(T, 8)
    tq = min(block_q, T8)
    # v7x megacore: keep the "parallel" grid extent (B * q_tiles) >= 2 so both
    # TensorCores get work; only relevant when B == 1 and one q tile covers T.
    if B * _cdiv(T8, tq) < 2 and T8 > 8:
        tq = _round_up(_cdiv(T8, 2), 8)
    tkv = min(block_kv, T8)
    if tkv % tq != 0 and tq % tkv != 0:
        tkv = tq                       # padded length must be a multiple of both
    T_pad = _round_up(T, max(tq, tkv))

    itemsize = jnp.dtype(compute_dtype).itemsize
    # Footprint if K/V for one batch element stay resident across all q tiles
    # (single kv tile => constant K/V index map across qi => no per-q-tile re-DMA).
    resident_bytes = (2 * 2 * T_pad * d_out * itemsize     # K,V blocks, double-buffered
                      + 2 * 2 * tq * d_out * itemsize      # Q,O blocks
                      + 2 * tq * T_pad * 4                 # f32 score/prob temporaries
                      + tq * (d_out + 2) * 4)              # acc/m/l scratch
    use_resident = (kv_resident is not False) and resident_bytes <= _KV_RESIDENT_VMEM_BUDGET
    if use_resident:
        tkv = T_pad
    if vmem_limit_bytes is None and use_resident and resident_bytes > 30 * 1024 * 1024:
        vmem_limit_bytes = 56 * 1024 * 1024   # above 32 MiB scoped default, < v7x 64 MiB

    num_q_tiles = T_pad // tq
    num_kv_tiles = T_pad // tkv

    # ---- fused, pre-scaled projection (x read from HBM once) --------------
    # Softmax scale 1/sqrt(d_out) and log2(e) (for in-kernel exp2) folded into
    # W_query at zero runtime cost; Q/K/V come out of one MXU-shaped matmul
    # already in the seq-padded layout -- no jnp.pad passes over activations.
    q_scale = _LOG2_E / float(d_out) ** 0.5
    w_fused = jnp.concatenate([w_query * q_scale, w_key, w_value], axis=1)
    w_fused = w_fused.astype(compute_dtype)
    if T_pad != T:
        x = jnp.pad(x, ((0, 0), (0, T_pad - T), (0, 0)))    # narrow d_in pad only
    x2d = x.reshape(B * T_pad, d_in).astype(compute_dtype)
    qkv = jnp.dot(x2d, w_fused, preferred_element_type=jnp.float32)
    qkv = qkv.astype(compute_dtype).reshape(B, T_pad, 3 * d_out)
    q = qkv[:, :, :d_out]
    k = qkv[:, :, d_out:2 * d_out]
    v = qkv[:, :, 2 * d_out:]

    kernel = functools.partial(
        _flash_attn_kernel,
        seq_len=T, block_kv=tkv, num_kv_tiles=num_kv_tiles,
        kv_padded=(T_pad != T), approx_recip=approx_recip)

    kv_kwargs = {}
    if kv_buffer_count != 2 and not use_resident:
        # Deeper K/V buffering hides DMA issue latency on bandwidth-poor v5e.
        kv_kwargs = dict(pipeline_mode=pl.Buffered(kv_buffer_count))

    kv_passes = 1 if use_resident else num_q_tiles
    cost = pl.CostEstimate(
        flops=4 * B * T_pad * T_pad * d_out,                 # QK^T + PV
        transcendentals=B * T_pad * T_pad,                   # exp2 per score
        bytes_accessed=int(B * T_pad * d_out * itemsize * (1 + 2 * kv_passes)
                           + B * T_pad * d_out * jnp.dtype(out_dtype).itemsize))

    out = pl.pallas_call(
        kernel,
        out_shape=jax.ShapeDtypeStruct((B, T_pad, d_out), out_dtype),
        grid_spec=pltpu.PrefetchScalarGridSpec(
            num_scalar_prefetch=0,
            grid=(B, num_q_tiles, num_kv_tiles),
            in_specs=[
                pl.BlockSpec((1, tq, d_out), lambda b, qi, ki: (b, qi, 0)),
                pl.BlockSpec((1, tkv, d_out), lambda b, qi, ki: (b, ki, 0), **kv_kwargs),
                pl.BlockSpec((1, tkv, d_out), lambda b, qi, ki: (b, ki, 0), **kv_kwargs),
            ],
            out_specs=pl.BlockSpec((1, tq, d_out), lambda b, qi, ki: (b, qi, 0)),
            scratch_shapes=[
                pltpu.VMEM((tq, 1), jnp.float32),      # running max (log2 domain)
                pltpu.VMEM((tq, 1), jnp.float32),      # running denominator
                pltpu.VMEM((tq, d_out), jnp.float32),  # output accumulator
            ],
        ),
        compiler_params=pltpu.CompilerParams(
            dimension_semantics=("parallel", "parallel", "arbitrary"),
            vmem_limit_bytes=vmem_limit_bytes),
        cost_estimate=cost,
    )(q, k, v)

    return out[:, :T, :]


def reference(x, w_query, w_key, w_value):
    q = x @ w_query
    k = x @ w_key
    v = x @ w_value
    s = q @ jnp.swapaxes(k, -2, -1)
    # Causal mask intentionally NOT applied (matches the reference's non-in-place
    # masked_fill whose result is discarded); dropout is eval-mode identity.
    w = jax.nn.softmax(s / (k.shape[-1] ** 0.5), axis=-1)
    return w @ v


if __name__ == "__main__":
    # Module hyperparameters (small, consistent with the forward pass).
    B, T = 2, 8
    d_in, d_out = 16, 32

    root = jax.random.PRNGKey(0)
    kx, kq, kk, kv_key, kx2 = jax.random.split(root, 5)

    x = jax.random.normal(kx, (B, T, d_in), dtype=jnp.float32)
    bound = 1.0 / (d_in ** 0.5)
    w_query = jax.random.uniform(kq, (d_in, d_out), jnp.float32, -bound, bound)
    w_key = jax.random.uniform(kk, (d_in, d_out), jnp.float32, -bound, bound)
    w_value = jax.random.uniform(kv_key, (d_in, d_out), jnp.float32, -bound, bound)

    ref = reference(x, w_query, w_key, w_value)

    # 1) Default fast path: bf16 operands, f32 accumulation, resident K/V, exp2.
    out = jax.block_until_ready(causal_self_attention(x, w_query, w_key, w_value))
    assert out.shape == (B, T, d_out)
    assert jnp.allclose(out, ref, atol=5e-2, rtol=5e-2), "bf16 fast path mismatch"

    # 2) f32 exactness check of the same kernel (exact reciprocal).
    out_f32 = jax.block_until_ready(causal_self_attention(
        x, w_query, w_key, w_value, compute_dtype=jnp.float32, approx_recip=False))
    assert jnp.allclose(out_f32, ref, atol=1e-4, rtol=1e-4), "f32 path mismatch"

    # 3) Multi-kv-tile online softmax + last-tile-only padded-key masking
    #    (T=20, 8-wide tiles, resident K/V disabled to force the tiled path).
    T2 = 20
    x2 = jax.random.normal(kx2, (B, T2, d_in), dtype=jnp.float32)
    ref2 = reference(x2, w_query, w_key, w_value)
    out2 = jax.block_until_ready(causal_self_attention(
        x2, w_query, w_key, w_value, block_q=8, block_kv=8,
        compute_dtype=jnp.float32, approx_recip=False, kv_resident=False))
    assert out2.shape == (B, T2, d_out)
    assert jnp.allclose(out2, ref2, atol=1e-4, rtol=1e-4), "tiled/masked path mismatch"

    # 4) Default (resident K/V) path with a padded sequence length, bf16.
    out2b = jax.block_until_ready(causal_self_attention(x2, w_query, w_key, w_value))
    assert jnp.allclose(out2b, ref2, atol=5e-2, rtol=5e-2), "resident padded path mismatch"

    print("KERNEL_OK")
</pallas_src>

<mosaic_0001>
module attributes {stable_mosaic.version = 11 : i64} {
  func.func @_flash_attn_kernel(%arg0: i32, %arg1: i32, %arg2: i32, %arg3: memref<1x8x32xbf16, #tpu.memory_space<vmem>>, %arg4: memref<1x8x32xbf16, #tpu.memory_space<vmem>>, %arg5: memref<1x8x32xbf16, #tpu.memory_space<vmem>>, %arg6: memref<1x8x32xf32, #tpu.memory_space<vmem>>, %arg7: memref<8x1xf32, #tpu.memory_space<vmem>>, %arg8: memref<8x1xf32, #tpu.memory_space<vmem>>, %arg9: memref<8x32xf32, #tpu.memory_space<vmem>>) attributes {dimension_semantics = [#tpu.dimension_semantics<parallel>, #tpu.dimension_semantics<parallel>, #tpu.dimension_semantics<arbitrary>], iteration_bounds = array<i64: 2, 1, 1>, scalar_prefetch = 0 : i64, scratch_operands = 3 : i64, tpu.core_type = #tpu.core_type<tc>, window_params = [{transform_indices = @transform_0, window_bounds = array<i64: 1, 8, 32>}, {transform_indices = @transform_1, window_bounds = array<i64: 1, 8, 32>}, {transform_indices = @transform_2, window_bounds = array<i64: 1, 8, 32>}, {transform_indices = @transform_3, window_bounds = array<i64: 1, 8, 32>}]} {
    %c0_i32 = arith.constant 0 : i32
    %0 = arith.cmpi eq, %arg2, %c0_i32 : i32
    %1 = arith.extui %0 : i1 to i32
    %c0_i32_0 = arith.constant 0 : i32
    %2 = arith.cmpi ne, %1, %c0_i32_0 : i32
    scf.if %2 {
      %cst_26 = arith.constant 0xFF800000 : f32
      %36 = vector.broadcast %cst_26 : f32 to vector<8x1xf32>
      %c0_27 = arith.constant 0 : index
      %c0_28 = arith.constant 0 : index
      %37 = vector.load %arg7[%c0_27, %c0_28] : memref<8x1xf32, #tpu.memory_space<vmem>>, vector<8x1xf32>
      tpu.vector_store %arg7[%c0_27, %c0_28], %36 {strides = array<i32>} : memref<8x1xf32, #tpu.memory_space<vmem>>, vector<8x1xf32>,
      %cst_29 = arith.constant 0.000000e+00 : f32
      %38 = vector.broadcast %cst_29 : f32 to vector<8x1xf32>
      %c0_30 = arith.constant 0 : index
      %c0_31 = arith.constant 0 : index
      %39 = vector.load %arg8[%c0_30, %c0_31] : memref<8x1xf32, #tpu.memory_space<vmem>>, vector<8x1xf32>
      tpu.vector_store %arg8[%c0_30, %c0_31], %38 {strides = array<i32>} : memref<8x1xf32, #tpu.memory_space<vmem>>, vector<8x1xf32>,
      %cst_32 = arith.constant 0.000000e+00 : f32
      %40 = vector.broadcast %cst_32 : f32 to vector<8x32xf32>
      %c0_33 = arith.constant 0 : index
      %c0_34 = arith.constant 0 : index
      %41 = vector.load %arg9[%c0_33, %c0_34] : memref<8x32xf32, #tpu.memory_space<vmem>>, vector<8x32xf32>
      tpu.vector_store %arg9[%c0_33, %c0_34], %40 {strides = array<i32>} : memref<8x32xf32, #tpu.memory_space<vmem>>, vector<8x32xf32>,
    } else {
    }
    %c0 = arith.constant 0 : index
    %c0_1 = arith.constant 0 : index
    %c0_2 = arith.constant 0 : index
    %3 = vector.load %arg3[%c0, %c0_1, %c0_2] : memref<1x8x32xbf16, #tpu.memory_space<vmem>>, vector<1x8x32xbf16>
    %4 = vector.shape_cast %3 : vector<1x8x32xbf16> to vector<8x32xbf16>
    %c0_3 = arith.constant 0 : index
    %c0_4 = arith.constant 0 : index
    %c0_5 = arith.constant 0 : index
    %5 = vector.load %arg4[%c0_3, %c0_4, %c0_5] : memref<1x8x32xbf16, #tpu.memory_space<vmem>>, vector<1x8x32xbf16>
    %6 = vector.shape_cast %5 : vector<1x8x32xbf16> to vector<8x32xbf16>
    %cst = arith.constant dense<0.000000e+00> : vector<8x8xf32>
    %7 = tpu.matmul %4, %6, %cst {dimension_numbers = #tpu.dot_dimension_numbers<[1], [1], [0], [0], [0, 0, 1, 0], [], []>} : vector<8x32xbf16>, vector<8x32xbf16>, vector<8x8xf32> -> vector<8x8xf32>
    %c0_6 = arith.constant 0 : index
    %c0_7 = arith.constant 0 : index
    %8 = vector.load %arg7[%c0_6, %c0_7] : memref<8x1xf32, #tpu.memory_space<vmem>>, vector<8x1xf32>
    %cst_8 = arith.constant dense<0xFF800000> : vector<8xf32>
    %9 = vector.multi_reduction <maximumf>, %7, %cst_8 [1] : vector<8x8xf32> to vector<8xf32>
    %10 = vector.shape_cast %9 : vector<8xf32> to vector<8x1xf32>
    %11 = arith.maximumf %8, %10 : vector<8x1xf32>
    %12 = arith.subf %8, %11 : vector<8x1xf32>
    %13 = math.exp2 %12 : vector<8x1xf32>
    %14 = vector.broadcast %11 : vector<8x1xf32> to vector<8x8xf32>
    %15 = arith.subf %7, %14 : vector<8x8xf32>
    %16 = math.exp2 %15 : vector<8x8xf32>
    %c0_9 = arith.constant 0 : index
    %c0_10 = arith.constant 0 : index
    %17 = vector.load %arg8[%c0_9, %c0_10] : memref<8x1xf32, #tpu.memory_space<vmem>>, vector<8x1xf32>
    %18 = arith.mulf %13, %17 : vector<8x1xf32>
    %cst_11 = arith.constant dense<0.000000e+00> : vector<8xf32>
    %19 = vector.multi_reduction <add>, %16, %cst_11 [1] : vector<8x8xf32> to vector<8xf32>
    %20 = vector.shape_cast %19 : vector<8xf32> to vector<8x1xf32>
    %21 = arith.addf %18, %20 : vector<8x1xf32>
    %c0_12 = arith.constant 0 : index
    %c0_13 = arith.constant 0 : index
    %22 = vector.load %arg8[%c0_12, %c0_13] : memref<8x1xf32, #tpu.memory_space<vmem>>, vector<8x1xf32>
    tpu.vector_store %arg8[%c0_12, %c0_13], %21 {strides = array<i32>} : memref<8x1xf32, #tpu.memory_space<vmem>>, vector<8x1xf32>,
    %c0_14 = arith.constant 0 : index
    %c0_15 = arith.constant 0 : index
    %23 = vector.load %arg9[%c0_14, %c0_15] : memref<8x32xf32, #tpu.memory_space<vmem>>, vector<8x32xf32>
    %24 = vector.broadcast %13 : vector<8x1xf32> to vector<8x32xf32>
    %25 = arith.mulf %24, %23 : vector<8x32xf32>
    %26 = arith.truncf %16 : vector<8x8xf32> to vector<8x8xbf16>
    %c0_16 = arith.constant 0 : index
    %c0_17 = arith.constant 0 : index
    %c0_18 = arith.constant 0 : index
    %27 = vector.load %arg5[%c0_16, %c0_17, %c0_18] : memref<1x8x32xbf16, #tpu.memory_space<vmem>>, vector<1x8x32xbf16>
    %28 = vector.shape_cast %27 : vector<1x8x32xbf16> to vector<8x32xbf16>
    %cst_19 = arith.constant dense<0.000000e+00> : vector<8x32xf32>
    %29 = tpu.matmul %26, %28, %cst_19 {dimension_numbers = #tpu.dot_dimension_numbers<[1], [0], [0], [1], [0, 0, 1, 1], [], []>} : vector<8x8xbf16>, vector<8x32xbf16>, vector<8x32xf32> -> vector<8x32xf32>
    %30 = arith.addf %25, %29 : vector<8x32xf32>
    %c0_20 = arith.constant 0 : index
    %c0_21 = arith.constant 0 : index
    %31 = vector.load %arg9[%c0_20, %c0_21] : memref<8x32xf32, #tpu.memory_space<vmem>>, vector<8x32xf32>
    tpu.vector_store %arg9[%c0_20, %c0_21], %30 {strides = array<i32>} : memref<8x32xf32, #tpu.memory_space<vmem>>, vector<8x32xf32>,
    %c0_22 = arith.constant 0 : index
    %c0_23 = arith.constant 0 : index
    %32 = vector.load %arg7[%c0_22, %c0_23] : memref<8x1xf32, #tpu.memory_space<vmem>>, vector<8x1xf32>
    tpu.vector_store %arg7[%c0_22, %c0_23], %11 {strides = array<i32>} : memref<8x1xf32, #tpu.memory_space<vmem>>, vector<8x1xf32>,
    %c0_i32_24 = arith.constant 0 : i32
    %33 = arith.cmpi eq, %arg2, %c0_i32_24 : i32
    %34 = arith.extui %33 : i1 to i32
    %c0_i32_25 = arith.constant 0 : i32
    %35 = arith.cmpi ne, %34, %c0_i32_25 : i32
    scf.if %35 {
      %c0_26 = arith.constant 0 : index
      %c0_27 = arith.constant 0 : index
      %36 = vector.load %arg8[%c0_26, %c0_27] : memref<8x1xf32, #tpu.memory_space<vmem>>, vector<8x1xf32>
      %37 = tpu.reciprocal %36 {approx = true} : vector<8x1xf32> -> vector<8x1xf32>
      %c0_28 = arith.constant 0 : index
      %c0_29 = arith.constant 0 : index
      %38 = vector.load %arg9[%c0_28, %c0_29] : memref<8x32xf32, #tpu.memory_space<vmem>>, vector<8x32xf32>
      %39 = vector.broadcast %37 : vector<8x1xf32> to vector<8x32xf32>
      %40 = arith.mulf %38, %39 : vector<8x32xf32>
      %c0_30 = arith.constant 0 : index
      %c0_31 = arith.constant 0 : index
      %c0_32 = arith.constant 0 : index
      %41 = vector.load %arg6[%c0_30, %c0_31, %c0_32] : memref<1x8x32xf32, #tpu.memory_space<vmem>>, vector<1x8x32xf32>
      %42 = vector.shape_cast %41 : vector<1x8x32xf32> to vector<8x32xf32>
      %43 = vector.shape_cast %40 : vector<8x32xf32> to vector<1x8x32xf32>
      tpu.vector_store %arg6[%c0_30, %c0_31, %c0_32], %43 {strides = array<i32>} : memref<1x8x32xf32, #tpu.memory_space<vmem>>, vector<1x8x32xf32>,
    } else {
    }
    return
  }
  func.func @transform_0(%arg0: i32, %arg1: i32, %arg2: i32) -> (i32, i32, i32) {
    %c0_i32 = arith.constant 0 : i32
    %c0_i32_0 = arith.constant 0 : i32
    return %arg0, %arg1, %c0_i32 : i32, i32, i32
  }
  func.func @transform_1(%arg0: i32, %arg1: i32, %arg2: i32) -> (i32, i32, i32) {
    %c0_i32 = arith.constant 0 : i32
    %c0_i32_0 = arith.constant 0 : i32
    return %arg0, %arg2, %c0_i32 : i32, i32, i32
  }
  func.func @transform_2(%arg0: i32, %arg1: i32, %arg2: i32) -> (i32, i32, i32) {
    %c0_i32 = arith.constant 0 : i32
    %c0_i32_0 = arith.constant 0 : i32
    return %arg0, %arg2, %c0_i32 : i32, i32, i32
  }
  func.func @transform_3(%arg0: i32, %arg1: i32, %arg2: i32) -> (i32, i32, i32) {
    %c0_i32 = arith.constant 0 : i32
    %c0_i32_0 = arith.constant 0 : i32
    return %arg0, %arg1, %c0_i32 : i32, i32, i32
  }
}

</mosaic_0001>

<llo_original>
// kernel: tpu_custom_call.1
$region0: #{tpu_custom_call.1}
  #allocation0 [shape = 'u32[]', space=smem, size = 0x4, offset = 0x4, fixed_abs, tag = 'smem constant byte address 0x4 - core index']
  #allocation1 [shape = 'u32[144,128]{1,0:T(1,128)}', space=vmem, size = 0x12000, scoped, tag = 'internal scratch']
  #allocation2 [shape = 'f32[8,1]{1,0:T(8,128)}', space=vmem, size = 0x1000, scoped, tag = 'scratch operand']
  #allocation3 [shape = 'f32[8,1]{1,0:T(8,128)}', space=vmem, size = 0x1000, scoped, tag = 'scratch operand']
  #allocation4 [shape = 'f32[8,32]{1,0:T(8,128)}', space=vmem, size = 0x1000, scoped, tag = 'scratch operand']
  %s0 = inlined_call_operand.hbm [shape: bf16[2,8,32], index: 0, kind: input, shape index: {}]
  %s1 = inlined_call_operand.hbm [shape: bf16[2,8,32], index: 1, kind: input, shape index: {}]
  %s2 = inlined_call_operand.hbm [shape: bf16[2,8,32], index: 2, kind: input, shape index: {}]
  %s3 = inlined_call_operand.hbm [shape: f32[2,8,32], index: 3, kind: output, shape index: {}]
  %s4 = sld [smem:[#allocation0]]
  $region65: #{tpu_custom_call.1} parent=0
    _
  %s6 = ssub.s32 1, %s4
  %s7 = scalar_select 0, %s6, %s4
  $region1: #{tpu_custom_call.1} parent=0
    #allocation5 [shape = 'u8[4096]{0}', space=vmem, size = 0x1000, scoped, tag = 'input window, operand 0']
    #allocation6 [shape = 's32[2]{0}', space=sflag, size = 0x8, scoped, tag = 'scoped memory for tpu_custom_call.1']
    #allocation7 [shape = 's32[2]{0}', space=sflag, size = 0x8, scoped, tag = 'scoped memory for tpu_custom_call.1']
    #allocation8 [shape = 'u8[4096]{0}', space=vmem, size = 0x1000, scoped, tag = 'input window, operand 1']
    #allocation9 [shape = 's32[2]{0}', space=sflag, size = 0x8, scoped, tag = 'scoped memory for tpu_custom_call.1']
    #allocation10 [shape = 'u8[4096]{0}', space=vmem, size = 0x1000, scoped, tag = 'input window, operand 2']
    #allocation11 [shape = 'u8[8192]{0}', space=vmem, size = 0x2000, scoped, tag = 'output window, operand 0']
    %8 = vsyncpa [#allocation6], 0
    %s9 = scalar_lea.sflag [#allocation6], 1
    %10 = vsyncpa %s9, 0
    %11 = vsyncpa [#allocation9], 0
    %s12 = scalar_lea.sflag [#allocation9], 1
    %13 = vsyncpa %s12, 0
    %14 = vsyncpa [#allocation7], 0
    %s15 = scalar_lea.sflag [#allocation7], 1
    %16 = vsyncpa %s15, 0
    loop: start=0, step=1, limit=4
    $region2: #{tpu_custom_call.1} parent=1 // loop_pre_header
      _
    $region3: #{tpu_custom_call.1} parent=1 // loop_header
      %s18 = sphi 0, %s22
      %p19 = scmp.ge.s32.totalorder %s18, 4
      %s25 = sphi 0, %s44
      %s26 = sphi 0, %s40
      %s27 = sphi 0, %s36
      %s28 = sphi 0, %s25
      %s29 = sphi 0, %s26
      %s30 = sphi 0, %s27
      %s31 = sphi 0, %s28
      %s32 = sphi 0, %s29
      %s33 = sphi 0, %s30
      %s49 = sphi 0, %s51
      %s52 = sphi 0, %s49
      %s53 = sphi 0, %s52
      %s69 = sphi 0, %s53
      %s77 = sphi 0, %s79
      %s80 = sphi 0, %s77
      %s81 = sphi 0, %s80
      %s97 = sphi 0, %s81
      %s105 = sphi 0, %s107
      %s108 = sphi 0, %s105
      %s109 = sphi 0, %s108
      %s125 = sphi 0, %s109
      %s133 = sphi 0, %s135
      %s136 = sphi 0, %s133
      %s137 = sphi 0, %s136
      %s153 = sphi 0, %s137
    $region4: #{tpu_custom_call.1} parent=1 // loop_header_branch
      %21 = sbr.rel (%p19) target = $region8
    $region5: #{tpu_custom_call.1} parent=1 // loop_body
      %s23 = ssub.s32 %s18, 1
      %s24 = ssub.s32 %s18, 2
      %s34 = sadd.s32 1, %s27
      %p35 = scmp.ge.s32.totalorder %s34, 1
      %s36 = scalar_select %p35, 0, %s34
      %s37 = sadd.s32 1, %s26
      %s38 = scalar_select %p35, %s37, %s26
      %p39 = scmp.ge.s32.totalorder %s38, 1
      %s40 = scalar_select %p39, 0, %s38
      %s41 = sadd.s32 1, %s25
      %s42 = scalar_select %p39, %s41, %s25
      %p43 = scmp.ge.s32.totalorder %s42, 2
      %s44 = scalar_select %p43, 0, %s42
      %s45 = ssub.s32 %s25, %s44
      %s46 = ssub.s32 %s26, %s40
      %s47 = sor.u32 %s45, %s46
      %p48 = scmp.eq.s32.totalorder %s47, 0
      %s50 = sadd.s32 %s49, 1
      %s51 = scalar_select %p48, %s49, %s50
      %p54 = pneg %p48
      %p55 = scmp.eq.s32.totalorder %s18, 1
      %p56 = por %p54, %p55
      %p57 = scmp.ne.s32.totalorder %s49, %s52
      %p58 = scmp.eq.s32.totalorder %s18, 0
      %p59 = por %p57, %p58
      %p60 = scmp.ne.s32.totalorder %s49, %s52
      %p61 = scmp.eq.s32.totalorder %s23, 1
      %p62 = por %p60, %p61
      %p63 = scmp.ne.s32.totalorder %s52, %s53
      %p64 = scmp.eq.s32.totalorder %s23, 0
      %p65 = por %p63, %p64
      %p66 = scmp.ne.s32.totalorder %s52, %s53
      %p67 = scmp.eq.s32.totalorder %s24, 1
      %p68 = por %p66, %p67
      %p70 = scmp.ne.s32.totalorder %s53, %s69
      %p71 = scmp.eq.s32.totalorder %s24, 0
      %p72 = por %p70, %p71
      %s73 = ssub.s32 %s25, %s44
      %s74 = ssub.s32 %s27, %s36
      %s75 = sor.u32 %s73, %s74
      %p76 = scmp.eq.s32.totalorder %s75, 0
      %s78 = sadd.s32 %s77, 1
      %s79 = scalar_select %p76, %s77, %s78
      %p82 = pneg %p76
      %p83 = scmp.eq.s32.totalorder %s18, 1
      %p84 = por %p82, %p83
      %p85 = scmp.ne.s32.totalorder %s77, %s80
      %p86 = scmp.eq.s32.totalorder %s18, 0
      %p87 = por %p85, %p86
      %p88 = scmp.ne.s32.totalorder %s77, %s80
      %p89 = scmp.eq.s32.totalorder %s23, 1
      %p90 = por %p88, %p89
      %p91 = scmp.ne.s32.totalorder %s80, %s81
      %p92 = scmp.eq.s32.totalorder %s23, 0
      %p93 = por %p91, %p92
      %p94 = scmp.ne.s32.totalorder %s80, %s81
      %p95 = scmp.eq.s32.totalorder %s24, 1
      %p96 = por %p94, %p95
      %p98 = scmp.ne.s32.totalorder %s81, %s97
      %p99 = scmp.eq.s32.totalorder %s24, 0
      %p100 = por %p98, %p99
      %s101 = ssub.s32 %s25, %s44
      %s102 = ssub.s32 %s27, %s36
      %s103 = sor.u32 %s101, %s102
      %p104 = scmp.eq.s32.totalorder %s103, 0
      %s106 = sadd.s32 %s105, 1
      %s107 = scalar_select %p104, %s105, %s106
      %p110 = pneg %p104
      %p111 = scmp.eq.s32.totalorder %s18, 1
      %p112 = por %p110, %p111
      %p113 = scmp.ne.s32.totalorder %s105, %s108
      %p114 = scmp.eq.s32.totalorder %s18, 0
      %p115 = por %p113, %p114
      %p116 = scmp.ne.s32.totalorder %s105, %s108
      %p117 = scmp.eq.s32.totalorder %s23, 1
      %p118 = por %p116, %p117
      %p119 = scmp.ne.s32.totalorder %s108, %s109
      %p120 = scmp.eq.s32.totalorder %s23, 0
      %p121 = por %p119, %p120
      %p122 = scmp.ne.s32.totalorder %s108, %s109
      %p123 = scmp.eq.s32.totalorder %s24, 1
      %p124 = por %p122, %p123
      %p126 = scmp.ne.s32.totalorder %s109, %s125
      %p127 = scmp.eq.s32.totalorder %s24, 0
      %p128 = por %p126, %p127
      %s129 = ssub.s32 %s25, %s44
      %s130 = ssub.s32 %s26, %s40
      %s131 = sor.u32 %s129, %s130
      %p132 = scmp.eq.s32.totalorder %s131, 0
      %s134 = sadd.s32 %s133, 1
      %s135 = scalar_select %p132, %s133, %s134
      %p138 = pneg %p132
      %p139 = scmp.eq.s32.totalorder %s18, 1
      %p140 = por %p138, %p139
      %p141 = scmp.ne.s32.totalorder %s133, %s136
      %p142 = scmp.eq.s32.totalorder %s18, 0
      %p143 = por %p141, %p142
      %p144 = scmp.ne.s32.totalorder %s133, %s136
      %p145 = scmp.eq.s32.totalorder %s23, 1
      %p146 = por %p144, %p145
      %p147 = scmp.ne.s32.totalorder %s136, %s137
      %p148 = scmp.eq.s32.totalorder %s23, 0
      %p149 = por %p147, %p148
      %p150 = scmp.ne.s32.totalorder %s136, %s137
      %p151 = scmp.eq.s32.totalorder %s24, 1
      %p152 = por %p150, %p151
      %p154 = scmp.ne.s32.totalorder %s137, %s153
      %p155 = scmp.eq.s32.totalorder %s24, 0
      %p156 = por %p154, %p155
      %p157 = scmp.le.s32.totalorder 1, %s18
      %p158 = scmp.lt.s32.totalorder %s18, 3
      %p159 = pnand %p157, %p158
      %p160 = pneg %p159
      // Predicated region
      $region9: #{tpu_custom_call.1} parent=5 // pred_check
        _
      $region10: #{tpu_custom_call.1} parent=5 // pred_check_branch
        %162 = sbr.rel (%p159) target = $region12
      $region11: #{tpu_custom_call.1} parent=5 // pred_region
        %s163 = ssub.s32 %s18, 1
      $region12: #{tpu_custom_call.1} parent=5 // pred_fallthru
        _
      %p164 = scmp.lt.s32.totalorder %s18, 2
      // Predicated region
      $region13: #{tpu_custom_call.1} parent=5 // pred_check
        %p165 = pneg %p164
      $region14: #{tpu_custom_call.1} parent=5 // pred_check_branch
        %167 = sbr.rel (%p165) target = $region16
      $region15: #{tpu_custom_call.1} parent=5 // pred_region
        // Predicated region
        $region17: #{tpu_custom_call.1} parent=15 // pred_check
          %p168 = pneg %p59
        $region18: #{tpu_custom_call.1} parent=15 // pred_check_branch
          %170 = sbr.rel (%p168) target = $region20
        $region19: #{tpu_custom_call.1} parent=15 // pred_region
          %s171 = sand.u32 %s49, 1
          %s172 = scalar_lea.sflag [#allocation6], %s171
          %s173 = sand.u32 %s49, 1
          %s174 = smul.addr %s173, 4
          %s175 = scalar_lea.vmem [#allocation5], %s174
          %s177 = ssub.s32 64, 64
          %178 = vsyncadd %s172, %s177
          %s179 = sadd.s32 %s26, %s25
          %s180 = smul.addr %s179, 64
          %s181 = scalar_lea.hbm %s0, %s180
          %s183 = sshll.u32 %s175, 4
          %s184 = int_to_ptr.vmem [resolvable:$true] %s183
          %186 = dma.hbm_to_vmem [thread:$0]  %s181, 64, %s184, %s172
        $region20: #{tpu_custom_call.1} parent=15 // pred_fallthru
          _
        // Predicated region
        $region21: #{tpu_custom_call.1} parent=15 // pred_check
          %p187 = pneg %p87
        $region22: #{tpu_custom_call.1} parent=15 // pred_check_branch
          %189 = sbr.rel (%p187) target = $region24
        $region23: #{tpu_custom_call.1} parent=15 // pred_region
          %s190 = sand.u32 %s18, 1
          %s191 = scalar_lea.sflag [#allocation9], %s190
          %s192 = sand.u32 %s77, 1
          %s193 = smul.addr %s192, 4
          %s194 = scalar_lea.vmem [#allocation8], %s193
          %s196 = ssub.s32 64, 64
          %197 = vsyncadd %s191, %s196
          %s198 = sadd.s32 %s27, %s25
          %s199 = smul.addr %s198, 64
          %s200 = scalar_lea.hbm %s1, %s199
          %s202 = sshll.u32 %s194, 4
          %s203 = int_to_ptr.vmem [resolvable:$true] %s202
          %205 = dma.hbm_to_vmem [thread:$0]  %s200, 64, %s203, %s191
        $region24: #{tpu_custom_call.1} parent=15 // pred_fallthru
          _
        // Predicated region
        $region25: #{tpu_custom_call.1} parent=15 // pred_check
          %p206 = pneg %p115
        $region26: #{tpu_custom_call.1} parent=15 // pred_check_branch
          %208 = sbr.rel (%p206) target = $region28
        $region27: #{tpu_custom_call.1} parent=15 // pred_region
          %s209 = sand.u32 %s18, 1
          %s210 = scalar_lea.sflag [#allocation9], %s209
          %s211 = sand.u32 %s105, 1
          %s212 = smul.addr %s211, 4
          %s213 = scalar_lea.vmem [#allocation10], %s212
          %s215 = ssub.s32 64, 64
          %216 = vsyncadd %s210, %s215
          %s217 = sadd.s32 %s27, %s25
          %s218 = smul.addr %s217, 64
          %s219 = scalar_lea.hbm %s2, %s218
          %s221 = sshll.u32 %s213, 4
          %s222 = int_to_ptr.vmem [resolvable:$true] %s221
          %224 = dma.hbm_to_vmem [thread:$0]  %s219, 64, %s222, %s210
        $region28: #{tpu_custom_call.1} parent=15 // pred_fallthru
          _
      $region16: #{tpu_custom_call.1} parent=5 // pred_fallthru
        _
      %p225 = scmp.le.s32.totalorder 1, %s18
      %p226 = scmp.lt.s32.totalorder %s18, 3
      %p227 = pnand %p225, %p226
      %p228 = pneg %p227
      // Predicated region
      $region29: #{tpu_custom_call.1} parent=5 // pred_check
        _
      $region30: #{tpu_custom_call.1} parent=5 // pred_check_branch
        %230 = sbr.rel (%p227) target = $region32
      $region31: #{tpu_custom_call.1} parent=5 // pred_region
        %s231 = ssub.s32 %s18, 1
        %s232 = sand.u32 %s52, 1
        %s233 = scalar_lea.sflag [#allocation6], %s232
        %s234 = sand.u32 %s52, 1
        %s235 = smul.addr %s234, 4
        %s236 = scalar_lea.vmem [#allocation5], %s235
        // Predicated region
        $region33: #{tpu_custom_call.1} parent=31 // pred_check
          %p237 = pneg %p65
        $region34: #{tpu_custom_call.1} parent=31 // pred_check_branch
          %239 = sbr.rel (%p237) target = $region36
        $region35: #{tpu_custom_call.1} parent=31 // pred_region
          %240 = dma.done %s233, 64
        $region36: #{tpu_custom_call.1} parent=31 // pred_fallthru
          _
        %s241 = sand.u32 %s23, 1
        %s242 = scalar_lea.sflag [#allocation9], %s241
        %s243 = sand.u32 %s80, 1
        %s244 = smul.addr %s243, 4
        %s245 = scalar_lea.vmem [#allocation8], %s244
        // Predicated region
        $region37: #{tpu_custom_call.1} parent=31 // pred_check
          %p246 = pneg %p93
        $region38: #{tpu_custom_call.1} parent=31 // pred_check_branch
          %248 = sbr.rel (%p246) target = $region40
        $region39: #{tpu_custom_call.1} parent=31 // pred_region
          %249 = dma.done %s242, 64
        $region40: #{tpu_custom_call.1} parent=31 // pred_fallthru
          _
        %s250 = sand.u32 %s23, 1
        %s251 = scalar_lea.sflag [#allocation9], %s250
        %s252 = sand.u32 %s108, 1
        %s253 = smul.addr %s252, 4
        %s254 = scalar_lea.vmem [#allocation10], %s253
        // Predicated region
        $region41: #{tpu_custom_call.1} parent=31 // pred_check
          %p255 = pneg %p121
        $region42: #{tpu_custom_call.1} parent=31 // pred_check_branch
          %257 = sbr.rel (%p255) target = $region44
        $region43: #{tpu_custom_call.1} parent=31 // pred_region
          %258 = dma.done %s251, 64
        $region44: #{tpu_custom_call.1} parent=31 // pred_fallthru
          _
        %s259 = sand.u32 %s52, 1
        %s260 = scalar_lea.sflag [#allocation6], %s259
        %s261 = sand.u32 %s52, 1
        %s262 = smul.addr %s261, 4
        %s263 = scalar_lea.vmem [#allocation5], %s262
        %p264 = pneg %p65
        %p265 = pneg %p62
        %s266 = sand.u32 %s23, 1
        %s267 = scalar_lea.sflag [#allocation9], %s266
        %s268 = sand.u32 %s80, 1
        %s269 = smul.addr %s268, 4
        %s270 = scalar_lea.vmem [#allocation8], %s269
        %p271 = pneg %p93
        %p272 = pneg %p90
        %s273 = sand.u32 %s23, 1
        %s274 = scalar_lea.sflag [#allocation9], %s273
        %s275 = sand.u32 %s108, 1
        %s276 = smul.addr %s275, 4
        %s277 = scalar_lea.vmem [#allocation10], %s276
        %p278 = pneg %p121
        %p279 = pneg %p118
        %p280 = pneg %p149
        %p281 = pneg %p146
        %s282 = sand.u32 %s136, 1
        %s283 = scalar_lea.sflag [#allocation7], %s282
        %s284 = sand.u32 %s136, 1
        %s285 = smul.addr %s284, 8
        %s286 = scalar_lea.vmem [#allocation11], %s285
        %p288 = scmp.eq.s32.totalorder %s30, 0
        // Predicated region
        $region45: #{tpu_custom_call.1} parent=31 // pred_check
          %p289 = pneg %p288
        $region46: #{tpu_custom_call.1} parent=31 // pred_check_branch
          %291 = sbr.rel (%p289) target = $region48
        $region47: #{tpu_custom_call.1} parent=31 // pred_region
          %vm292 = vcmask 7168
          %293 = vst.msk [vmem:[#allocation2] sm:$0xff] %vm292, -inf
          %294 = vst.msk [vmem:[#allocation3] sm:$0xff] %vm292, 0.0
          %vm295 = vcmask 261120
          %296 = vst.msk [vmem:[#allocation4] sm:$0xff] %vm295, 0.0
        $region48: #{tpu_custom_call.1} parent=31 // pred_fallthru
          _
        %v297 = vld [vmem:[%s236] sm:$0xf]
        %v298 = vld [vmem:[%s245] sm:$0xf]
        %vm299 = vcmask 261120
        %v301 = vsel %vm299, %v297, 0
        %v304 = vsel %vm299, %v298, 0
        %306 = vmatprep.subr.bf16.mxu0 0
        %307 = vmatpush1.bf16.xpose.msra.mxu0 %v304
        %308 = vmatprep.subr.bf16.mxu0 0
        %309 = vmatpush1.bf16.xpose.msra.mxu0 0
        %310 = vmatprep.subr.bf16.mxu0 0
        %311 = vmatpush1.bf16.xpose.msra.mxu0 0
        %312 = vmatprep.subr.bf16.mxu0 0
        %313 = vmatpush1.bf16.xpose.msra.mxu0 0
        %314 = vmatprep.subr.bf16.mxu0 0
        %315 = vmatpush1.bf16.xpose.msra.mxu0 0
        %316 = vmatprep.subr.bf16.mxu0 0
        %317 = vmatpush1.bf16.xpose.msra.mxu0 0
        %318 = vmatprep.subr.bf16.mxu0 0
        %319 = vmatpush1.bf16.xpose.msra.mxu0 0
        %320 = vmatprep.subr.bf16.mxu0 0
        %321 = vmatpush1.bf16.xpose.msra.mxu0 0
        %322 = vmatprep.subr.bf16.mxu0 0
        %323 = vmatpush1.bf16.xpose.msra.mxu0 0
        %324 = vmatprep.subr.bf16.mxu0 0
        %325 = vmatpush1.bf16.xpose.msra.mxu0 0
        %326 = vmatprep.subr.bf16.mxu0 0
        %327 = vmatpush1.bf16.xpose.msra.mxu0 0
        %328 = vmatprep.subr.bf16.mxu0 0
        %329 = vmatpush1.bf16.xpose.msra.mxu0 0
        %330 = vmatprep.subr.bf16.mxu0 0
        %331 = vmatpush1.bf16.xpose.msra.mxu0 0
        %332 = vmatprep.subr.bf16.mxu0 0
        %333 = vmatpush1.bf16.xpose.msra.mxu0 0
        %334 = vmatprep.subr.bf16.mxu0 0
        %335 = vmatpush1.bf16.xpose.msra.mxu0 0
        %336 = vmatprep.subr.bf16.mxu0 0
        %337 = vmatpush1.bf16.xpose.msra.mxu0 0
        %338 = vmatprep.mubr.bf16.mxu0 0
        %339 = vmatmul.mubr.bf16.gmra.mrb[0].mxu0 %v301
        %v340 = vpop.f32.mrb[0].mxu0
        %v341 = vadd.f32 0.0, %v340
        %v342 = vpop.f32.mrb[0].mxu0
        %v343 = vpop.f32.mrb[0].mxu0
        %v344 = vpop.f32.mrb[0].mxu0
        %345 = vdwg.mxu0
        %v346 = vld [vmem:[#allocation2] sm:$0xff]
        %vm347 = vcmask 64512
        %v348 = vsel %vm347, %v341, -inf
        %349 = vmax.xlane.f32.xlu0 %v348
        %v350 = vpop.xlane.xlu0 %349
        %v351 = vmax.f32 %v346, %v350
        %v352 = vsub.f32 %v346, %v351
        %v353 = vpow.pop %v352
        %355 = vset.pattern.permute.xlu0 0
        %356 = vperm.xlu0 %355, %v351
        %v357 = vpop.permute.xlu0 %356
        %v359 = vsub.f32 %v341, %v357
        %v360 = vpow.pop %v359
        %v361 = vld [vmem:[#allocation3] sm:$0xff]
        %v362 = vmul.f32 %v353, %v361
        %v363 = vsel %vm347, %v360, 0.0
        %364 = vadd.xlane.f32.xlu0 %v363
        %v365 = vpop.xlane.xlu0 %364
        %v366 = vadd.f32 %v362, %v365
        %vm367 = vcmask 7168
        %368 = vst.msk [vmem:[#allocation3] sm:$0xff] %vm367, %v366
        %v369 = vld [vmem:[#allocation4] sm:$0xff]
        %371 = vset.pattern.permute.xlu0 0
        %372 = vperm.xlu0 %371, %v353
        %v373 = vpop.permute.xlu0 %372
        %v375 = vmul.f32 %v373, %v369
        %v376 = vpack.c.bf16 %v360, %v360
        %v377 = vld [vmem:[%s254] sm:$0xf]
        %v379 = vsel %vm347, %v376, 0
        %vm381 = vcmask 1043456
        %v383 = vsel %vm381, %v377, 0
        %385 = vmatprep.subr.bf16.mxu0 0
        %386 = vmatpush1.bf16.msra.mxu0 %v383
        %387 = vmatprep.subr.bf16.mxu0 0
        %388 = vmatpush1.bf16.msra.mxu0 0
        %389 = vmatprep.subr.bf16.mxu0 0
        %390 = vmatpush1.bf16.msra.mxu0 0
        %391 = vmatprep.subr.bf16.mxu0 0
        %392 = vmatpush1.bf16.msra.mxu0 0
        %393 = vmatprep.subr.bf16.mxu0 0
        %394 = vmatpush1.bf16.msra.mxu0 0
        %395 = vmatprep.subr.bf16.mxu0 0
        %396 = vmatpush1.bf16.msra.mxu0 0
        %397 = vmatprep.subr.bf16.mxu0 0
        %398 = vmatpush1.bf16.msra.mxu0 0
        %399 = vmatprep.subr.bf16.mxu0 0
        %400 = vmatpush1.bf16.msra.mxu0 0
        %401 = vmatprep.subr.bf16.mxu0 0
        %402 = vmatpush1.bf16.msra.mxu0 0
        %403 = vmatprep.subr.bf16.mxu0 0
        %404 = vmatpush1.bf16.msra.mxu0 0
        %405 = vmatprep.subr.bf16.mxu0 0
        %406 = vmatpush1.bf16.msra.mxu0 0
        %407 = vmatprep.subr.bf16.mxu0 0
        %408 = vmatpush1.bf16.msra.mxu0 0
        %409 = vmatprep.subr.bf16.mxu0 0
        %410 = vmatpush1.bf16.msra.mxu0 0
        %411 = vmatprep.subr.bf16.mxu0 0
        %412 = vmatpush1.bf16.msra.mxu0 0
        %413 = vmatprep.subr.bf16.mxu0 0
        %414 = vmatpush1.bf16.msra.mxu0 0
        %415 = vmatprep.subr.bf16.mxu0 0
        %416 = vmatpush1.bf16.msra.mxu0 0
        %417 = vmatprep.mubr.bf16.mxu0 0
        %418 = vmatmul.mubr.bf16.gmra.mrb[0].mxu0 %v379
        %v419 = vpop.f32.mrb[0].mxu0
        %v420 = vadd.f32 0.0, %v419
        %v421 = vpop.f32.mrb[0].mxu0
        %v422 = vpop.f32.mrb[0].mxu0
        %v423 = vpop.f32.mrb[0].mxu0
        %424 = vdwg.mxu0
        %v425 = vadd.f32 %v375, %v420
        %426 = vst.msk [vmem:[#allocation4] sm:$0xff] %vm299, %v425
        %427 = vst.msk [vmem:[#allocation2] sm:$0xff] %vm367, %v351
        // Predicated region
        $region49: #{tpu_custom_call.1} parent=31 // pred_check
          %p428 = pneg %p288
        $region50: #{tpu_custom_call.1} parent=31 // pred_check_branch
          %430 = sbr.rel (%p428) target = $region52
        $region51: #{tpu_custom_call.1} parent=31 // pred_region
          %v431 = vld [vmem:[#allocation3] sm:$0xff]
          %v432 = vrcp.pop %v431
          %v433 = vld [vmem:[#allocation4] sm:$0xff]
          %435 = vset.pattern.permute.xlu0 0
          %436 = vperm.xlu0 %435, %v432
          %v437 = vpop.permute.xlu0 %436
          %v439 = vmul.f32 %v433, %v437
          %440 = vst.msk [vmem:[%s286] sm:$0xff] %vm299, %v439
        $region52: #{tpu_custom_call.1} parent=31 // pred_fallthru
          _
        %s441 = sand.u32 %s136, 1
        %s442 = scalar_lea.sflag [#allocation7], %s441
        %s443 = sand.u32 %s136, 1
        %s444 = smul.addr %s443, 8
        %s445 = scalar_lea.vmem [#allocation11], %s444
        // Predicated region
        $region53: #{tpu_custom_call.1} parent=31 // pred_check
          %p446 = pneg %p146
        $region54: #{tpu_custom_call.1} parent=31 // pred_check_branch
          %448 = sbr.rel (%p446) target = $region56
        $region55: #{tpu_custom_call.1} parent=31 // pred_region
          %s450 = ssub.s32 128, 128
          %451 = vsyncadd %s442, %s450
          %s452 = sadd.s32 %s29, %s28
          %s453 = smul.addr %s452, 128
          %s454 = scalar_lea.hbm %s3, %s453
          %s456 = sshll.u32 %s445, 4
          %s457 = int_to_ptr.vmem [resolvable:$true] %s456
          %459 = dma.vmem_to_hbm [thread:$0]  %s457, 128, %s454, %s442
        $region56: #{tpu_custom_call.1} parent=31 // pred_fallthru
          _
      $region32: #{tpu_custom_call.1} parent=5 // pred_fallthru
        _
      %p460 = scmp.le.s32.totalorder 2, %s18
      // Predicated region
      $region57: #{tpu_custom_call.1} parent=5 // pred_check
        %p461 = pneg %p460
      $region58: #{tpu_custom_call.1} parent=5 // pred_check_branch
        %463 = sbr.rel (%p461) target = $region60
      $region59: #{tpu_custom_call.1} parent=5 // pred_region
        %s464 = ssub.s32 %s18, 2
        // Predicated region
        $region61: #{tpu_custom_call.1} parent=59 // pred_check
          %p465 = pneg %p152
        $region62: #{tpu_custom_call.1} parent=59 // pred_check_branch
          %467 = sbr.rel (%p465) target = $region64
        $region63: #{tpu_custom_call.1} parent=59 // pred_region
          %s468 = sand.u32 %s137, 1
          %s469 = scalar_lea.sflag [#allocation7], %s468
          %s470 = sand.u32 %s137, 1
          %s471 = smul.addr %s470, 8
          %s472 = scalar_lea.vmem [#allocation11], %s471
          %473 = dma.done %s469, 128
        $region64: #{tpu_custom_call.1} parent=59 // pred_fallthru
          _
      $region60: #{tpu_custom_call.1} parent=5 // pred_fallthru
        _
    $region6: #{tpu_custom_call.1} parent=1 // loop_footer
      %s22 = sadd.s32 1, %s18
    $region7: #{tpu_custom_call.1} parent=1 // loop_footer_branch
      %17 = sbr.rel target = $region3
    $region8: #{tpu_custom_call.1} parent=1 // loop_exit
      _
    %474 = vsyncpa [#allocation6], 1
    %s475 = scalar_lea.sflag [#allocation6], 1
    %476 = vsyncpa %s475, 1
    %477 = vsyncpa [#allocation9], 1
    %s478 = scalar_lea.sflag [#allocation9], 1
    %479 = vsyncpa %s478, 1
    %480 = vsyncpa [#allocation7], 1
    %s481 = scalar_lea.sflag [#allocation7], 1
    %482 = vsyncpa %s481, 1

</llo_original>
